<compile_context>
chip_gen: v5e
topology: v5e:2x2
jax: 0.10.0
libtpu: 0.0.40
codegen_flags: <defaults>
</compile_context>

<pallas_src>
import functools

import jax
import jax.numpy as jnp
from jax.experimental import pallas as pl
from jax.experimental.pallas import tpu as pltpu

BN_EPS = 1e-5


def _layer_kernel(x_ref, w_ref, g_ref, be_ref, a_ref, *rest, add_skip):
    """One fused Linear(no-bias) -> BatchNorm1d(train) -> PReLU block, one N-tile."""
    if add_skip:
        skip_ref, o_ref = rest
    else:
        (o_ref,) = rest

    # bf16 x bf16 -> f32 on the MXU.  Bias is dropped (cancelled by BN's mean
    # subtraction in training mode).
    y = jnp.dot(x_ref[...], w_ref[...], preferred_element_type=jnp.float32)

    # BatchNorm1d, training mode: batch mean / biased batch variance, per
    # output feature.  Batch is whole per invocation, so stats are exact.
    mean = jnp.mean(y, axis=0, keepdims=True)
    centered = y - mean                      # computed once, reused twice
    var = jnp.mean(centered * centered, axis=0, keepdims=True)
    scale = g_ref[...] * jax.lax.rsqrt(var + BN_EPS)   # gamma folded into rsqrt
    yn = centered * scale + be_ref[...]

    # PReLU with a single shared learnable slope (scalar lives in SMEM).
    a = a_ref[0, 0]
    act = jnp.where(yn >= 0, yn, a * yn)
    # Dropout(p=0.0) is the identity.

    if add_skip:
        act = act + skip_ref[...].astype(jnp.float32)
    o_ref[...] = act.astype(o_ref.dtype)


def _pick_tn(hidden):
    """Largest lane tile in {512, 256, 128} dividing `hidden`, weight slab <= 8 MiB."""
    for tn in (512, 256, 128):
        if hidden % tn != 0:
            continue
        if tn == 128 or hidden * tn * 2 <= (8 << 20):
            return tn
    return hidden  # hidden not a multiple of 128: single whole-axis block


def _linear_bn_prelu_layer(x_bf16, w_bf16, gamma, beta, prelu_a, *,
                           skip=None, out_dtype=jnp.float32):
    batch, hidden = x_bf16.shape
    assert w_bf16.shape == (hidden, hidden)
    tn = _pick_tn(hidden)
    grid = (hidden // tn,)

    in_specs = [
        pl.BlockSpec((batch, hidden), lambda j: (0, 0)),   # activation, resident
        pl.BlockSpec((hidden, tn), lambda j: (0, j)),      # weight N-tile (bf16)
        pl.BlockSpec((1, tn), lambda j: (0, j)),           # BN gamma tile
        pl.BlockSpec((1, tn), lambda j: (0, j)),           # BN beta tile
        pl.BlockSpec((1, 1), lambda j: (0, 0),             # PReLU slope scalar
                     memory_space=pltpu.MemorySpace.SMEM),
    ]
    args = [x_bf16, w_bf16, gamma, beta, prelu_a]
    if skip is not None:
        in_specs.append(pl.BlockSpec((batch, tn), lambda j: (0, j)))
        args.append(skip)
    out_specs = pl.BlockSpec((batch, tn), lambda j: (0, j))

    out_isize = jnp.dtype(out_dtype).itemsize
    x_bytes = batch * hidden * 2
    per_step = (hidden * tn * 2            # weight tile
                + 2 * tn * 4               # gamma + beta tiles
                + batch * tn * out_isize   # output tile
                + (batch * tn * 4 if skip is not None else 0))
    need = x_bytes + 2 * per_step          # 2-deep buffering on the tiled refs
    vmem_limit = int(min(max(need + (4 << 20), 32 << 20), 128 << 20))

    cost = pl.CostEstimate(
        flops=2 * batch * hidden * hidden + 10 * batch * hidden,
        transcendentals=hidden,
        bytes_accessed=(x_bytes + hidden * hidden * 2 + 2 * hidden * 4 + 4
                        + batch * hidden * out_isize
                        + (batch * hidden * 4 if skip is not None else 0)),
    )

    kernel = functools.partial(_layer_kernel, add_skip=skip is not None)
    return pl.pallas_call(
        kernel,
        grid=grid,
        in_specs=in_specs,
        out_specs=out_specs,
        out_shape=jax.ShapeDtypeStruct((batch, hidden), out_dtype),
        compiler_params=pltpu.CompilerParams(
            dimension_semantics=("parallel",),
            vmem_limit_bytes=vmem_limit,
        ),
        cost_estimate=cost,
    )(*args)


def linear_layers_forward(x, params, *, use_skip=False, num_layers=2):
    """x: (batch, hidden) f32.  params: dict with bf16 weights + f32 BN/PReLU params."""
    h = x
    for i in range(1, num_layers + 1):
        is_last = i == num_layers
        h = _linear_bn_prelu_layer(
            h.astype(jnp.bfloat16),                 # no-op when already bf16
            params[f"w{i}t_bf16"],
            params[f"gamma{i}"],
            params[f"beta{i}"],
            params[f"prelu{i}"],
            skip=x if (use_skip and is_last) else None,
            out_dtype=(x.dtype if is_last else jnp.bfloat16),
        )
    return h


# ----------------------------- references ------------------------------------

def _reference_forward_f32(x, params, *, use_skip=False, num_layers=2):
    """PyTorch-faithful f32 reference (with bias, f32 matmuls)."""
    h = x
    for i in range(1, num_layers + 1):
        y = h @ params[f"w{i}t"] + params[f"b{i}"]
        mean = jnp.mean(y, axis=0, keepdims=True)
        var = jnp.mean((y - mean) ** 2, axis=0, keepdims=True)
        y = (y - mean) * jax.lax.rsqrt(var + BN_EPS)
        y = y * params[f"gamma{i}"] + params[f"beta{i}"]
        a = params[f"prelu{i}"][0, 0]
        h = jnp.where(y >= 0, y, a * y)
    return x + h if use_skip else h


def _reference_forward_bf16(x, params, *, use_skip=False, num_layers=2):
    """Mirrors the kernel math exactly (bf16 matmul operands, bias dropped)."""
    h = x
    for i in range(1, num_layers + 1):
        y = jnp.dot(h.astype(jnp.bfloat16), params[f"w{i}t_bf16"],
                    preferred_element_type=jnp.float32)
        mean = jnp.mean(y, axis=0, keepdims=True)
        c = y - mean
        var = jnp.mean(c * c, axis=0, keepdims=True)
        scale = params[f"gamma{i}"] * jax.lax.rsqrt(var + BN_EPS)
        y = c * scale + params[f"beta{i}"]
        a = params[f"prelu{i}"][0, 0]
        h = jnp.where(y >= 0, y, a * y)
    return x + h if use_skip else h


def make_params(key, hidden):
    """Deterministic synthetic parameters matching the PyTorch module's shapes."""
    params = {}
    for i in (1, 2):
        key, kw, kb, kg, _ = jax.random.split(key, 5)
        bound = 1.0 / jnp.sqrt(hidden)
        w = jax.random.uniform(kw, (hidden, hidden), jnp.float32, -bound, bound)
        params[f"w{i}t"] = w.T                                  # f32 (reference)
        params[f"w{i}t_bf16"] = w.T.astype(jnp.bfloat16)        # pre-converted for kernel
        params[f"b{i}"] = jax.random.uniform(
            kb, (1, hidden), jnp.float32, -bound, bound)        # used by f32 ref only
        params[f"gamma{i}"] = jax.random.uniform(               # nn.init.uniform_(bn.weight)
            kg, (1, hidden), jnp.float32, 0.0, 1.0)
        params[f"beta{i}"] = jnp.zeros((1, hidden), jnp.float32)    # BN bias init = 0
        params[f"prelu{i}"] = jnp.full((1, 1), 0.25, jnp.float32)   # PReLU default slope
    return params


if __name__ == "__main__":
    key = jax.random.PRNGKey(0)
    batch, hidden = 8, 128

    key, kx, kp = jax.random.split(key, 3)
    x = jax.random.normal(kx, (batch, hidden), jnp.float32)
    params = make_params(kp, hidden)

    # use_skip=False (module default)
    out = jax.block_until_ready(linear_layers_forward(x, params, use_skip=False))
    assert out.shape == (batch, hidden)
    ref_b = _reference_forward_bf16(x, params, use_skip=False)
    ref_f = _reference_forward_f32(x, params, use_skip=False)
    # Tight check vs a reference that mirrors the kernel math exactly.
    assert jnp.allclose(out, ref_b, atol=5e-3, rtol=5e-3), "mismatch vs bf16 reference"
    # Loose check vs the PyTorch-faithful f32 reference (bf16 matmul error only).
    assert jnp.allclose(out, ref_f, atol=1e-1, rtol=1e-1), "mismatch vs f32 reference"

    # use_skip=True path
    out_s = jax.block_until_ready(linear_layers_forward(x, params, use_skip=True))
    ref_bs = _reference_forward_bf16(x, params, use_skip=True)
    assert jnp.allclose(out_s, ref_bs, atol=5e-3, rtol=5e-3), "skip path mismatch"

    print("KERNEL_OK")
</pallas_src>

<mosaic_0001>
module attributes {stable_mosaic.version = 11 : i64} {
  func.func @_layer_kernel(%arg0: i32, %arg1: memref<8x128xbf16, #tpu.memory_space<vmem>>, %arg2: memref<128x128xbf16, #tpu.memory_space<vmem>>, %arg3: memref<1x128xf32, #tpu.memory_space<vmem>>, %arg4: memref<1x128xf32, #tpu.memory_space<vmem>>, %arg5: memref<1x1xf32, #tpu.memory_space<smem>>, %arg6: memref<8x128xbf16, #tpu.memory_space<vmem>>) attributes {dimension_semantics = [#tpu.dimension_semantics<parallel>], iteration_bounds = array<i64: 1>, scalar_prefetch = 0 : i64, scratch_operands = 0 : i64, tpu.core_type = #tpu.core_type<tc>, window_params = [{pipeline_mode = #tpu.pipeline_mode<synchronous>, transform_indices = @transform_0, window_bounds = array<i64: 8, 128>}, {transform_indices = @transform_1, window_bounds = array<i64: 128, 128>}, {transform_indices = @transform_2, window_bounds = array<i64: 1, 128>}, {transform_indices = @transform_3, window_bounds = array<i64: 1, 128>}, {transform_indices = @transform_4, window_bounds = array<i64: 1, 1>}, {transform_indices = @transform_5, window_bounds = array<i64: 8, 128>}]} {
    %c0 = arith.constant 0 : index
    %c0_0 = arith.constant 0 : index
    %0 = vector.load %arg1[%c0, %c0_0] : memref<8x128xbf16, #tpu.memory_space<vmem>>, vector<8x128xbf16>
    %c0_1 = arith.constant 0 : index
    %c0_2 = arith.constant 0 : index
    %1 = vector.load %arg2[%c0_1, %c0_2] : memref<128x128xbf16, #tpu.memory_space<vmem>>, vector<128x128xbf16>
    %cst = arith.constant dense<0.000000e+00> : vector<8x128xf32>
    %2 = tpu.matmul %0, %1, %cst {dimension_numbers = #tpu.dot_dimension_numbers<[1], [0], [0], [1], [0, 0, 1, 1], [], []>} : vector<8x128xbf16>, vector<128x128xbf16>, vector<8x128xf32> -> vector<8x128xf32>
    %cst_3 = arith.constant dense<0.000000e+00> : vector<128xf32>
    %3 = vector.multi_reduction <add>, %2, %cst_3 [0] : vector<8x128xf32> to vector<128xf32>
    %4 = vector.shape_cast %3 : vector<128xf32> to vector<1x128xf32>
    %cst_4 = arith.constant 8.000000e+00 : f32
    %5 = vector.broadcast %cst_4 : f32 to vector<1x128xf32>
    %6 = arith.divf %4, %5 : vector<1x128xf32>
    %7 = vector.broadcast %6 : vector<1x128xf32> to vector<8x128xf32>
    %8 = arith.subf %2, %7 : vector<8x128xf32>
    %9 = arith.mulf %8, %8 : vector<8x128xf32>
    %cst_5 = arith.constant dense<0.000000e+00> : vector<128xf32>
    %10 = vector.multi_reduction <add>, %9, %cst_5 [0] : vector<8x128xf32> to vector<128xf32>
    %11 = vector.shape_cast %10 : vector<128xf32> to vector<1x128xf32>
    %cst_6 = arith.constant 8.000000e+00 : f32
    %12 = vector.broadcast %cst_6 : f32 to vector<1x128xf32>
    %13 = arith.divf %11, %12 : vector<1x128xf32>
    %c0_7 = arith.constant 0 : index
    %c0_8 = arith.constant 0 : index
    %14 = vector.load %arg3[%c0_7, %c0_8] : memref<1x128xf32, #tpu.memory_space<vmem>>, vector<1x128xf32>
    %cst_9 = arith.constant 9.99999974E-6 : f32
    %15 = vector.broadcast %cst_9 : f32 to vector<1x128xf32>
    %16 = arith.addf %13, %15 : vector<1x128xf32>
    %17 = math.rsqrt %16 : vector<1x128xf32>
    %18 = arith.mulf %14, %17 : vector<1x128xf32>
    %19 = vector.broadcast %18 : vector<1x128xf32> to vector<8x128xf32>
    %20 = arith.mulf %8, %19 : vector<8x128xf32>
    %c0_10 = arith.constant 0 : index
    %c0_11 = arith.constant 0 : index
    %21 = vector.load %arg4[%c0_10, %c0_11] : memref<1x128xf32, #tpu.memory_space<vmem>>, vector<1x128xf32>
    %22 = vector.broadcast %21 : vector<1x128xf32> to vector<8x128xf32>
    %23 = arith.addf %20, %22 : vector<8x128xf32>
    %c0_12 = arith.constant 0 : index
    %c0_13 = arith.constant 0 : index
    %24 = memref.load %arg5[%c0_12, %c0_13] : memref<1x1xf32, #tpu.memory_space<smem>>
    %cst_14 = arith.constant 0.000000e+00 : f32
    %25 = vector.broadcast %cst_14 : f32 to vector<8x128xf32>
    %26 = arith.cmpf oge, %23, %25 : vector<8x128xf32>
    %27 = vector.broadcast %24 : f32 to vector<8x128xf32>
    %28 = arith.mulf %27, %23 : vector<8x128xf32>
    %29 = arith.select %26, %23, %28 : vector<8x128xi1>, vector<8x128xf32>
    %30 = arith.truncf %29 : vector<8x128xf32> to vector<8x128xbf16>
    %c0_15 = arith.constant 0 : index
    %c0_16 = arith.constant 0 : index
    %31 = vector.load %arg6[%c0_15, %c0_16] : memref<8x128xbf16, #tpu.memory_space<vmem>>, vector<8x128xbf16>
    tpu.vector_store %arg6[%c0_15, %c0_16], %30 {strides = array<i32>} : memref<8x128xbf16, #tpu.memory_space<vmem>>, vector<8x128xbf16>,
    return
  }
  func.func @transform_0(%arg0: i32) -> (i32, i32) {
    %c0_i32 = arith.constant 0 : i32
    %c0_i32_0 = arith.constant 0 : i32
    %c0_i32_1 = arith.constant 0 : i32
    return %c0_i32, %c0_i32_0 : i32, i32
  }
  func.func @transform_1(%arg0: i32) -> (i32, i32) {
    %c0_i32 = arith.constant 0 : i32
    %c0_i32_0 = arith.constant 0 : i32
    return %c0_i32, %arg0 : i32, i32
  }
  func.func @transform_2(%arg0: i32) -> (i32, i32) {
    %c0_i32 = arith.constant 0 : i32
    %c0_i32_0 = arith.constant 0 : i32
    return %c0_i32, %arg0 : i32, i32
  }
  func.func @transform_3(%arg0: i32) -> (i32, i32) {
    %c0_i32 = arith.constant 0 : i32
    %c0_i32_0 = arith.constant 0 : i32
    return %c0_i32, %arg0 : i32, i32
  }
  func.func @transform_4(%arg0: i32) -> (i32, i32) {
    %c0_i32 = arith.constant 0 : i32
    %c0_i32_0 = arith.constant 0 : i32
    %c0_i32_1 = arith.constant 0 : i32
    return %c0_i32, %c0_i32_0 : i32, i32
  }
  func.func @transform_5(%arg0: i32) -> (i32, i32) {
    %c0_i32 = arith.constant 0 : i32
    %c0_i32_0 = arith.constant 0 : i32
    return %c0_i32, %arg0 : i32, i32
  }
}

</mosaic_0001>

<llo_original>
// kernel: tpu_custom_call.1
$region0: #{tpu_custom_call.1}
  #allocation0 [shape = 'u32[]', space=smem, size = 0x4, offset = 0x4, fixed_abs, tag = 'smem constant byte address 0x4 - core index']
  #allocation1 [shape = 'u32[72,128]{1,0:T(1,128)}', space=vmem, size = 0x9000, scoped, tag = 'internal scratch']
  #allocation2 [shape = 'f32[1,1]{1,0:T(1,128)S(6)}', space=smem, size = 0x200, scoped, tag = 'scoped memory for tpu_custom_call.1']
  %s0 = inlined_call_operand.hbm [shape: bf16[8,128], index: 0, kind: input, shape index: {}]
  %s1 = inlined_call_operand.hbm [shape: bf16[128,128], index: 1, kind: input, shape index: {}]
  %s2 = inlined_call_operand.vmem [shape: f32[1,128], index: 2, kind: input, shape index: {}]
  %s3 = inlined_call_operand.vmem [shape: f32[1,128], index: 3, kind: input, shape index: {}]
  %s4 = inlined_call_operand.<no memory space> [shape: f32[1,1], index: 4, kind: input, shape index: {}]
  %s5 = inlined_call_operand.hbm [shape: bf16[8,128], index: 5, kind: output, shape index: {}]
  %s6 = sld [smem:[#allocation0]]
  $region38: #{tpu_custom_call.1} parent=0
    _
  %s8 = ssub.s32 1, %s6
  %s9 = scalar_select 0, %s8, %s6
  %10 = sst [smem:[#allocation2]] %s4
  $region1: #{tpu_custom_call.1} parent=0
    #allocation3 [shape = 'u8[2048]{0}', space=vmem, size = 0x800, scoped, tag = 'input window, operand 0, single buffered']
    #allocation4 [shape = 's32[1]{0}', space=sflag, size = 0x4, scoped, tag = 'scoped memory for tpu_custom_call.1']
    #allocation5 [shape = 's32[1]{0}', space=sflag, size = 0x4, scoped, tag = 'scoped memory for tpu_custom_call.1']
    #allocation6 [shape = 'u8[32768]{0}', space=vmem, size = 0x8000, scoped, tag = 'input window, operand 1, single buffered']
    #allocation7 [shape = 's32[1]{0}', space=sflag, size = 0x4, scoped, tag = 'scoped memory for tpu_custom_call.1']
    #allocation8 [shape = 'u8[2048]{0}', space=vmem, size = 0x800, scoped, tag = 'output window, operand 0, single buffered']
    %11 = vsyncpa [#allocation4], 0
    %12 = vsyncpa [#allocation7], 0
    %13 = vsyncpa [#allocation5], 0
    // Predicated region
    $region2: #{tpu_custom_call.1} parent=1 // pred_check
      _
    $region3: #{tpu_custom_call.1} parent=1 // pred_check_branch
      %15 = sbr.rel (0) target = $region5
    $region4: #{tpu_custom_call.1} parent=1 // pred_region
      %17 = vsyncadd [#allocation4], 0
      %s19 = sshll.u32 %s0, 4
      %s20 = int_to_ptr.hbm [resolvable:$true] %s19
      %s21 = sshll.u32 [#allocation3], 4
      %s22 = int_to_ptr.vmem [resolvable:$true] %s21
      %24 = dma.hbm_to_vmem [thread:$0]  %s20, 64, %s22, [#allocation4]
    $region5: #{tpu_custom_call.1} parent=1 // pred_fallthru
      _
    // Predicated region
    $region6: #{tpu_custom_call.1} parent=1 // pred_check
      _
    $region7: #{tpu_custom_call.1} parent=1 // pred_check_branch
      %26 = sbr.rel (0) target = $region9
    $region8: #{tpu_custom_call.1} parent=1 // pred_region
      %28 = vsyncadd [#allocation7], 0
      %s29 = sshll.u32 %s1, 4
      %s30 = int_to_ptr.hbm [resolvable:$true] %s29
      %s31 = sshll.u32 [#allocation6], 4
      %s32 = int_to_ptr.vmem [resolvable:$true] %s31
      %37 = dma.hbm_to_vmem [thread:$0]  %s30, 1024, %s32, [#allocation7], 64, 64, 4
    $region9: #{tpu_custom_call.1} parent=1 // pred_fallthru
      _
    // Predicated region
    $region10: #{tpu_custom_call.1} parent=1 // pred_check
      _
    $region11: #{tpu_custom_call.1} parent=1 // pred_check_branch
      %39 = sbr.rel (0) target = $region13
    $region12: #{tpu_custom_call.1} parent=1 // pred_region
      _
    $region13: #{tpu_custom_call.1} parent=1 // pred_fallthru
      _
    // Predicated region
    $region14: #{tpu_custom_call.1} parent=1 // pred_check
      _
    $region15: #{tpu_custom_call.1} parent=1 // pred_check_branch
      %41 = sbr.rel (0) target = $region17
    $region16: #{tpu_custom_call.1} parent=1 // pred_region
      _
    $region17: #{tpu_custom_call.1} parent=1 // pred_fallthru
      _
    // Predicated region
    $region18: #{tpu_custom_call.1} parent=1 // pred_check
      _
    $region19: #{tpu_custom_call.1} parent=1 // pred_check_branch
      %43 = sbr.rel (0) target = $region21
    $region20: #{tpu_custom_call.1} parent=1 // pred_region
      _
    $region21: #{tpu_custom_call.1} parent=1 // pred_fallthru
      _
    // Predicated region
    $region22: #{tpu_custom_call.1} parent=1 // pred_check
      _
    $region23: #{tpu_custom_call.1} parent=1 // pred_check_branch
      %45 = sbr.rel (0) target = $region25
    $region24: #{tpu_custom_call.1} parent=1 // pred_region
      %47 = dma.done [#allocation4], 64
    $region25: #{tpu_custom_call.1} parent=1 // pred_fallthru
      _
    // Predicated region
    $region26: #{tpu_custom_call.1} parent=1 // pred_check
      _
    $region27: #{tpu_custom_call.1} parent=1 // pred_check_branch
      %49 = sbr.rel (0) target = $region29
    $region28: #{tpu_custom_call.1} parent=1 // pred_region
      %51 = dma.done [#allocation7], 1024
    $region29: #{tpu_custom_call.1} parent=1 // pred_fallthru
      _
    %v52 = vld [vmem:[#allocation3] sm:$0xf]
    %v53 = vld [vmem:[#allocation6] sm:$0xf]
    %v54 = vld [vmem:[#allocation6 + $0x4] sm:$0xf]
    %v55 = vld [vmem:[#allocation6 + $0x8] sm:$0xf]
    %v56 = vld [vmem:[#allocation6 + $0xc] sm:$0xf]
    %v57 = vld [vmem:[#allocation6 + $0x10] sm:$0xf]
    %v58 = vld [vmem:[#allocation6 + $0x14] sm:$0xf]
    %v59 = vld [vmem:[#allocation6 + $0x18] sm:$0xf]
    %v60 = vld [vmem:[#allocation6 + $0x1c] sm:$0xf]
    %v61 = vld [vmem:[#allocation6 + $0x20] sm:$0xf]
    %v62 = vld [vmem:[#allocation6 + $0x24] sm:$0xf]
    %v63 = vld [vmem:[#allocation6 + $0x28] sm:$0xf]
    %v64 = vld [vmem:[#allocation6 + $0x2c] sm:$0xf]
    %v65 = vld [vmem:[#allocation6 + $0x30] sm:$0xf]
    %v66 = vld [vmem:[#allocation6 + $0x34] sm:$0xf]
    %v67 = vld [vmem:[#allocation6 + $0x38] sm:$0xf]
    %v68 = vld [vmem:[#allocation6 + $0x3c] sm:$0xf]
    %v85 = vunpack.c.l.b16 %v53
    %v86 = vunpack.c.l.b16 %v54
    %v87 = vunpack.c.l.b16 %v55
    %v88 = vunpack.c.l.b16 %v56
    %v89 = vunpack.c.l.b16 %v57
    %v90 = vunpack.c.l.b16 %v58
    %v91 = vunpack.c.l.b16 %v59
    %v92 = vunpack.c.l.b16 %v60
    %v93 = vunpack.c.l.b16 %v61
    %v94 = vunpack.c.l.b16 %v62
    %v95 = vunpack.c.l.b16 %v63
    %v96 = vunpack.c.l.b16 %v64
    %v97 = vunpack.c.l.b16 %v65
    %v98 = vunpack.c.l.b16 %v66
    %v99 = vunpack.c.l.b16 %v67
    %v100 = vunpack.c.l.b16 %v68
    %v101 = vpack.c.b16 %v86, %v85
    %v102 = vpack.c.b16 %v88, %v87
    %v103 = vpack.c.b16 %v90, %v89
    %v104 = vpack.c.b16 %v92, %v91
    %v105 = vpack.c.b16 %v94, %v93
    %v106 = vpack.c.b16 %v96, %v95
    %v107 = vpack.c.b16 %v98, %v97
    %v108 = vpack.c.b16 %v100, %v99
    %117 = vmatpush.bf16.msra.mxu0 %v108
    %118 = vmatpush.bf16.msra.mxu0 %v107
    %119 = vmatpush.bf16.msra.mxu0 %v106
    %120 = vmatpush.bf16.msra.mxu0 %v105
    %121 = vmatpush.bf16.msra.mxu0 %v104
    %122 = vmatpush.bf16.msra.mxu0 %v103
    %123 = vmatpush.bf16.msra.mxu0 %v102
    %124 = vmatpush.bf16.msra.mxu0 %v101
    %125 = vmatmul.bf16.gmra.mxu0 %v52
    %v126 = vpop.f32.mrf.mxu0
    %v127 = vadd.f32 0.0, %v126
    %v128 = vpop.f32.mrf.mxu0
    %129 = vdwg.mxu0
    %v130 = vrot.slane %v127, 4
    %v131 = vadd.f32 %v127, %v130
    %v132 = vrot.slane %v131, 2
    %v133 = vadd.f32 %v131, %v132
    %v134 = vrot.slane %v133, 1
    %v135 = vadd.f32 %v133, %v134
    %v136 = vrcp.pop 8.0
    %v137 = vmul.f32 8.0, %v136
    %v138 = vsub.f32 1.0, %v137
    %v139 = vmul.f32 %v136, %v138
    %v140 = vadd.f32 %v136, %v139
    %vm141 = vweird.f32 %v136
    %v142 = vsel %vm141, %v136, %v140
    %v143 = vmul.f32 %v135, %v142
    %v144 = vsub.f32 %v127, %v143
    %v145 = vmul.f32 %v144, %v144
    %v146 = vrot.slane %v145, 4
    %v147 = vadd.f32 %v145, %v146
    %v148 = vrot.slane %v147, 2
    %v149 = vadd.f32 %v147, %v148
    %v150 = vrot.slane %v149, 1
    %v151 = vadd.f32 %v149, %v150
    %v152 = vmul.f32 %v151, %v142
    %v153 = vld [vmem:[%s2] sm:$0x1]
    %v154 = vadd.f32 %v152, 1e-05
    %v155 = vrsqrt.pop %v154
    %v156 = vmul.f32 %v155, %v154
    %v157 = vmul.f32 %v156, %v155
    %v158 = vmul.f32 0.5, %v157
    %v159 = vsub.f32 1.5, %v158
    %v160 = vmul.f32 %v155, %v159
    %vm161 = vweird.f32 %v154
    %vm162 = vweird.f32 %v155
    %vm163 = vmor %vm161, %vm162
    %v164 = vsel %vm163, %v155, %v160
    %v165 = vmul.f32 %v153, %v164
    %v167 = vperm.slane %v165, 0
    %v169 = vmul.f32 %v144, %v167
    %v170 = vld [vmem:[%s3] sm:$0x1]
    %v172 = vperm.slane %v170, 0
    %v174 = vadd.f32 %v169, %v172
    %s175 = sld [smem:[#allocation2]]
    %vm176 = vcmp.ge.f32.partialorder %v174, 0.0
    %v177 = vstv %s175
    %v178 = vmul.f32 %v177, %v174
    %v179 = vsel %vm176, %v174, %v178
    %v180 = vpack.c.bf16 %v179, %v179
    %181 = vst [vmem:[#allocation8] sm:$0xf] %v180
    // Predicated region
    $region30: #{tpu_custom_call.1} parent=1 // pred_check
      _
    $region31: #{tpu_custom_call.1} parent=1 // pred_check_branch
      %183 = sbr.rel (0) target = $region33
    $region32: #{tpu_custom_call.1} parent=1 // pred_region
      %185 = vsyncadd [#allocation5], 0
      %s187 = sshll.u32 [#allocation8], 4
      %s188 = int_to_ptr.vmem [resolvable:$true] %s187
      %s189 = sshll.u32 %s5, 4
      %s190 = int_to_ptr.hbm [resolvable:$true] %s189
      %192 = dma.vmem_to_hbm [thread:$0]  %s188, 64, %s190, [#allocation5]
    $region33: #{tpu_custom_call.1} parent=1 // pred_fallthru
      _
    // Predicated region
    $region34: #{tpu_custom_call.1} parent=1 // pred_check
      _
    $region35: #{tpu_custom_call.1} parent=1 // pred_check_branch
      %194 = sbr.rel (0) target = $region37
    $region36: #{tpu_custom_call.1} parent=1 // pred_region
      %196 = dma.done [#allocation5], 64
    $region37: #{tpu_custom_call.1} parent=1 // pred_fallthru
      _
    %197 = vsyncpa [#allocation4], 1
    %198 = vsyncpa [#allocation7], 1
    %199 = vsyncpa [#allocation5], 1

</llo_original>
